<compile_context>
chip_gen: v5e
topology: v5e:2x2
jax: 0.10.0
libtpu: 0.0.40
codegen_flags: <defaults>
</compile_context>

<pallas_src>
import math

import jax
import jax.numpy as jnp
from jax.experimental import pallas as pl
from jax.experimental.pallas import tpu as pltpu


def _round_up(x, m):
    return (x + m - 1) // m * m


def _make_kernel(num_layers):
    """Fused MLP kernel: num_layers pre-transposed Linear layers, ReLU between
    all but the last. Layer 0 is the (pre-folded) GInvariant layer; only its
    LHS is cast to the layer-0 weight dtype (bf16 fast path), tail layers stay
    f32 end to end."""

    def kernel(x_ref, *rest):
        out_ref = rest[-1]
        wb_refs = rest[:-1]          # interleaved (w_t, b) pairs, w_t is (in, out)
        assert len(wb_refs) == 2 * num_layers

        h = x_ref[...]               # f32 tile straight from HBM
        for i in range(num_layers):
            w = wb_refs[2 * i][...]          # (in_i, out_i), pre-transposed
            b = wb_refs[2 * i + 1][...]      # (1, out_i), f32
            lhs = h.astype(w.dtype) if i == 0 else h   # bf16 cast only at layer 0
            h = jnp.dot(lhs, w, preferred_element_type=jnp.float32) + b
            if i < num_layers - 1:
                h = jnp.maximum(h, 0.0)
        out_ref[...] = h.astype(out_ref.dtype)

    return kernel


def ginv_mlp_forward(x, alphas_2d, basis, b1, tail_weights, tail_biases, *,
                     output_dim, tile_m=None, compute_dtype=jnp.bfloat16,
                     xla_fallback_rows=0):
    """x: (batch, input_size) float32. Returns (batch, output_dim) float32.

    xla_fallback_rows: below this many rows, skip Pallas entirely (single-step
    grids are pure overhead).  Default 0 so tests always exercise the kernel;
    production callers may want ~128.
    """
    batch, input_size = x.shape
    out0, num_basis = alphas_2d.shape
    assert basis.shape == (num_basis, input_size)

    if batch < xla_fallback_rows:
        # Tiny batch: plain XLA is cheaper than an un-pipelined kernel launch.
        return reference_forward(x, alphas_2d, basis, b1,
                                 tail_weights, tail_biases)

    # ---- Hoist the GInvariant weight construction out of the kernel:
    #      W1 = alphas @ basis, stored pre-transposed as (input_size, out0).
    #      Only this layer-0 weight is quantized to compute_dtype; tail layers
    #      stay f32 (their FLOPs/bytes are negligible).
    w1_t = (alphas_2d @ basis).T

    weights_t = [w1_t.astype(compute_dtype)]
    biases = [b1.reshape(1, -1).astype(jnp.float32)]
    for w, b in zip(tail_weights, tail_biases):
        weights_t.append(w.T.astype(jnp.float32))
        biases.append(b.reshape(1, -1).astype(jnp.float32))
    num_layers = len(weights_t)

    # ---- Batch tiling: large MXU-friendly tiles (cap 1024), 16-row aligned.
    #      Target >= 4 grid steps so v7x (2 TCs) keeps both megacore sharding
    #      and per-core prefetch overlap; neutral on v5e/v6e.  No wrapper-side
    #      pad: the grid uses cdiv and Pallas handles the ragged last block
    #      (garbage rows only feed discarded out-of-bounds output rows).
    align = 16
    if tile_m is None:
        tile_m = min(1024, _round_up(max(pl.cdiv(batch, 4), 1), align))
    tile_m = max(8, min(tile_m, _round_up(batch, 8)))   # don't exceed the batch
    grid = (pl.cdiv(batch, tile_m),)

    # ---- Block specs: x/out tiled over batch, parameters as full-array blocks
    #      (index_map constant -> kept resident across grid steps).
    def const_spec(shape):
        return pl.BlockSpec(shape, lambda i: (0, 0))

    in_specs = [pl.BlockSpec((tile_m, input_size), lambda i: (i, 0))]
    args = [x]                      # original f32 x, no pad/cast materialization
    for w, b in zip(weights_t, biases):
        in_specs.append(const_spec(w.shape))
        in_specs.append(const_spec(b.shape))
        args.append(w)
        args.append(b)

    # ---- Output: exact (batch, output_dim) f32 array; block last dim equals
    #      the full array dim so no 128-lane padding and 8x less write traffic.
    out_specs = pl.BlockSpec((tile_m, output_dim), lambda i: (i, 0))

    # ---- Explicit VMEM budget: double-buffered x/out tiles + resident params.
    #      Capped at 48 MiB to leave headroom under v7x's 64 MiB per TC.
    vmem_est = 2 * tile_m * input_size * 4                 # x tile (f32), dbl-buf
    vmem_est += 2 * tile_m * output_dim * 4                # out tile, dbl-buf
    vmem_est += 2 * sum(int(w.size) * w.dtype.itemsize + int(b.size) * 4
                        for w, b in zip(weights_t, biases))
    vmem_limit = int(min(max(2 * vmem_est + (8 << 20), 32 << 20), 48 << 20))

    return pl.pallas_call(
        _make_kernel(num_layers),
        out_shape=jax.ShapeDtypeStruct((batch, output_dim), jnp.float32),
        grid=grid,
        in_specs=in_specs,
        out_specs=out_specs,
        compiler_params=pltpu.CompilerParams(
            dimension_semantics=("parallel",),
            vmem_limit_bytes=vmem_limit),
    )(*args)


def reference_forward(x, alphas_2d, basis, b1, tail_weights, tail_biases):
    w1 = alphas_2d @ basis
    h = jnp.maximum(x @ w1.T + b1, 0.0)
    n = len(tail_weights)
    for i, (w, b) in enumerate(zip(tail_weights, tail_biases)):
        h = h @ w.T + b
        if i < n - 1:
            h = jnp.maximum(h, 0.0)
    return h


if __name__ == "__main__":
    # Small shapes consistent with the module:
    #   raw input X: (2, 4, 16, 16) -> reshape(-1, input_size), input_size=256
    #   => flattened batch 8, input_size 256
    input_size = 256
    layer_sizes = [64, 32]
    output_dim = 16
    num_basis = 64          # rows of the (synthetic) invariant basis rf-{input_size}.npy

    key = jax.random.PRNGKey(0)
    keys = jax.random.split(key, 4 + len(layer_sizes))
    k_x, k_xbig, k_basis, k_alpha = keys[0], keys[1], keys[2], keys[3]
    k_layers = keys[4:]

    # Input image-like tensor, flattened exactly like torch's reshape(-1, input_size).
    x_raw = jax.random.normal(k_x, (2, 4, 16, 16), dtype=jnp.float32)
    x = x_raw.reshape(-1, input_size)                    # (8, 256)

    # GInvariantLayer parameters (synthetic deterministic basis instead of rf-*.npy).
    basis = jax.random.normal(k_basis, (num_basis, input_size), dtype=jnp.float32)
    stdv = 1.0 / math.sqrt(layer_sizes[0])
    alphas_2d = jax.random.uniform(k_alpha, (layer_sizes[0], num_basis),
                                   minval=-stdv, maxval=stdv, dtype=jnp.float32)
    b1 = jnp.zeros((1, layer_sizes[0]), dtype=jnp.float32)   # bias zero-init as in module

    # Tail Linear layers: Linear(64->32)+ReLU, Linear(32->16)
    dims = layer_sizes + [output_dim]
    tail_weights, tail_biases = [], []
    for i in range(len(layer_sizes)):
        fan_in, fan_out = dims[i], dims[i + 1]
        bound = 1.0 / math.sqrt(fan_in)
        kw, kb = jax.random.split(k_layers[i])
        tail_weights.append(jax.random.uniform(
            kw, (fan_out, fan_in), minval=-bound, maxval=bound, dtype=jnp.float32))
        tail_biases.append(jax.random.uniform(
            kb, (1, fan_out), minval=-bound, maxval=bound, dtype=jnp.float32))

    y_ref = reference_forward(x, alphas_2d, basis, b1, tail_weights, tail_biases)

    # f32 path (correctness gate, tight tolerance against the f32 reference).
    y_f32 = ginv_mlp_forward(x, alphas_2d, basis, b1, tail_weights, tail_biases,
                             output_dim=output_dim, compute_dtype=jnp.float32)
    y_f32 = jax.block_until_ready(y_f32)
    assert y_f32.shape == (8, output_dim)
    assert jnp.allclose(y_f32, y_ref, atol=1e-4, rtol=1e-4)

    # Default bf16-in / f32-accumulate fast path; tail layers stay f32, so the
    # tolerance can be much tighter than a fully-bf16 pipeline.
    y_bf16 = ginv_mlp_forward(x, alphas_2d, basis, b1, tail_weights, tail_biases,
                              output_dim=output_dim)
    y_bf16 = jax.block_until_ready(y_bf16)
    assert y_bf16.shape == (8, output_dim)
    assert jnp.allclose(y_bf16, y_ref, atol=5e-2, rtol=5e-2)

    # Larger batch exercising the multi-step (>= 4) pipelined grid.
    x_big = jax.random.normal(k_xbig, (4096, input_size), dtype=jnp.float32)
    y_big_ref = reference_forward(x_big, alphas_2d, basis, b1,
                                  tail_weights, tail_biases)
    y_big = ginv_mlp_forward(x_big, alphas_2d, basis, b1,
                             tail_weights, tail_biases, output_dim=output_dim)
    y_big = jax.block_until_ready(y_big)
    assert y_big.shape == (4096, output_dim)
    assert jnp.allclose(y_big, y_big_ref, atol=5e-2, rtol=5e-2)

    print("KERNEL_OK")
</pallas_src>

<mosaic_0001>
module attributes {stable_mosaic.version = 11 : i64} {
  func.func @kernel(%arg0: i32, %arg1: memref<8x256xf32, #tpu.memory_space<vmem>>, %arg2: memref<256x64xf32, #tpu.memory_space<vmem>>, %arg3: memref<1x64xf32, #tpu.memory_space<vmem>>, %arg4: memref<64x32xf32, #tpu.memory_space<vmem>>, %arg5: memref<1x32xf32, #tpu.memory_space<vmem>>, %arg6: memref<32x16xf32, #tpu.memory_space<vmem>>, %arg7: memref<1x16xf32, #tpu.memory_space<vmem>>, %arg8: memref<8x16xf32, #tpu.memory_space<vmem>>) attributes {dimension_semantics = [#tpu.dimension_semantics<parallel>], iteration_bounds = array<i64: 1>, scalar_prefetch = 0 : i64, scratch_operands = 0 : i64, tpu.core_type = #tpu.core_type<tc>, window_params = [{transform_indices = @transform_0, window_bounds = array<i64: 8, 256>}, {pipeline_mode = #tpu.pipeline_mode<synchronous>, transform_indices = @transform_1, window_bounds = array<i64: 256, 64>}, {pipeline_mode = #tpu.pipeline_mode<synchronous>, transform_indices = @transform_2, window_bounds = array<i64: 1, 64>}, {pipeline_mode = #tpu.pipeline_mode<synchronous>, transform_indices = @transform_3, window_bounds = array<i64: 64, 32>}, {pipeline_mode = #tpu.pipeline_mode<synchronous>, transform_indices = @transform_4, window_bounds = array<i64: 1, 32>}, {pipeline_mode = #tpu.pipeline_mode<synchronous>, transform_indices = @transform_5, window_bounds = array<i64: 32, 16>}, {pipeline_mode = #tpu.pipeline_mode<synchronous>, transform_indices = @transform_6, window_bounds = array<i64: 1, 16>}, {transform_indices = @transform_7, window_bounds = array<i64: 8, 16>}]} {
    %c0 = arith.constant 0 : index
    %c0_0 = arith.constant 0 : index
    %0 = vector.load %arg1[%c0, %c0_0] : memref<8x256xf32, #tpu.memory_space<vmem>>, vector<8x256xf32>
    %c0_1 = arith.constant 0 : index
    %c0_2 = arith.constant 0 : index
    %1 = vector.load %arg2[%c0_1, %c0_2] : memref<256x64xf32, #tpu.memory_space<vmem>>, vector<256x64xf32>
    %c0_3 = arith.constant 0 : index
    %c0_4 = arith.constant 0 : index
    %2 = vector.load %arg3[%c0_3, %c0_4] : memref<1x64xf32, #tpu.memory_space<vmem>>, vector<1x64xf32>
    %cst = arith.constant dense<0.000000e+00> : vector<8x64xf32>
    %3 = tpu.matmul %0, %1, %cst {dimension_numbers = #tpu.dot_dimension_numbers<[1], [0], [0], [1], [0, 0, 1, 1], [], []>} : vector<8x256xf32>, vector<256x64xf32>, vector<8x64xf32> -> vector<8x64xf32>
    %4 = vector.broadcast %2 : vector<1x64xf32> to vector<8x64xf32>
    %5 = arith.addf %3, %4 : vector<8x64xf32>
    %cst_5 = arith.constant 0.000000e+00 : f32
    %6 = vector.broadcast %cst_5 : f32 to vector<8x64xf32>
    %7 = arith.maximumf %5, %6 : vector<8x64xf32>
    %c0_6 = arith.constant 0 : index
    %c0_7 = arith.constant 0 : index
    %8 = vector.load %arg4[%c0_6, %c0_7] : memref<64x32xf32, #tpu.memory_space<vmem>>, vector<64x32xf32>
    %c0_8 = arith.constant 0 : index
    %c0_9 = arith.constant 0 : index
    %9 = vector.load %arg5[%c0_8, %c0_9] : memref<1x32xf32, #tpu.memory_space<vmem>>, vector<1x32xf32>
    %cst_10 = arith.constant dense<0.000000e+00> : vector<8x32xf32>
    %10 = tpu.matmul %7, %8, %cst_10 {dimension_numbers = #tpu.dot_dimension_numbers<[1], [0], [0], [1], [0, 0, 1, 1], [], []>} : vector<8x64xf32>, vector<64x32xf32>, vector<8x32xf32> -> vector<8x32xf32>
    %11 = vector.broadcast %9 : vector<1x32xf32> to vector<8x32xf32>
    %12 = arith.addf %10, %11 : vector<8x32xf32>
    %cst_11 = arith.constant 0.000000e+00 : f32
    %13 = vector.broadcast %cst_11 : f32 to vector<8x32xf32>
    %14 = arith.maximumf %12, %13 : vector<8x32xf32>
    %c0_12 = arith.constant 0 : index
    %c0_13 = arith.constant 0 : index
    %15 = vector.load %arg6[%c0_12, %c0_13] : memref<32x16xf32, #tpu.memory_space<vmem>>, vector<32x16xf32>
    %c0_14 = arith.constant 0 : index
    %c0_15 = arith.constant 0 : index
    %16 = vector.load %arg7[%c0_14, %c0_15] : memref<1x16xf32, #tpu.memory_space<vmem>>, vector<1x16xf32>
    %cst_16 = arith.constant dense<0.000000e+00> : vector<8x16xf32>
    %17 = tpu.matmul %14, %15, %cst_16 {dimension_numbers = #tpu.dot_dimension_numbers<[1], [0], [0], [1], [0, 0, 1, 1], [], []>} : vector<8x32xf32>, vector<32x16xf32>, vector<8x16xf32> -> vector<8x16xf32>
    %18 = vector.broadcast %16 : vector<1x16xf32> to vector<8x16xf32>
    %19 = arith.addf %17, %18 : vector<8x16xf32>
    %c0_17 = arith.constant 0 : index
    %c0_18 = arith.constant 0 : index
    %20 = vector.load %arg8[%c0_17, %c0_18] : memref<8x16xf32, #tpu.memory_space<vmem>>, vector<8x16xf32>
    tpu.vector_store %arg8[%c0_17, %c0_18], %19 {strides = array<i32>} : memref<8x16xf32, #tpu.memory_space<vmem>>, vector<8x16xf32>,
    return
  }
  func.func @transform_0(%arg0: i32) -> (i32, i32) {
    %c0_i32 = arith.constant 0 : i32
    %c0_i32_0 = arith.constant 0 : i32
    return %arg0, %c0_i32 : i32, i32
  }
  func.func @transform_1(%arg0: i32) -> (i32, i32) {
    %c0_i32 = arith.constant 0 : i32
    %c0_i32_0 = arith.constant 0 : i32
    %c0_i32_1 = arith.constant 0 : i32
    return %c0_i32, %c0_i32_0 : i32, i32
  }
  func.func @transform_2(%arg0: i32) -> (i32, i32) {
    %c0_i32 = arith.constant 0 : i32
    %c0_i32_0 = arith.constant 0 : i32
    %c0_i32_1 = arith.constant 0 : i32
    return %c0_i32, %c0_i32_0 : i32, i32
  }
  func.func @transform_3(%arg0: i32) -> (i32, i32) {
    %c0_i32 = arith.constant 0 : i32
    %c0_i32_0 = arith.constant 0 : i32
    %c0_i32_1 = arith.constant 0 : i32
    return %c0_i32, %c0_i32_0 : i32, i32
  }
  func.func @transform_4(%arg0: i32) -> (i32, i32) {
    %c0_i32 = arith.constant 0 : i32
    %c0_i32_0 = arith.constant 0 : i32
    %c0_i32_1 = arith.constant 0 : i32
    return %c0_i32, %c0_i32_0 : i32, i32
  }
  func.func @transform_5(%arg0: i32) -> (i32, i32) {
    %c0_i32 = arith.constant 0 : i32
    %c0_i32_0 = arith.constant 0 : i32
    %c0_i32_1 = arith.constant 0 : i32
    return %c0_i32, %c0_i32_0 : i32, i32
  }
  func.func @transform_6(%arg0: i32) -> (i32, i32) {
    %c0_i32 = arith.constant 0 : i32
    %c0_i32_0 = arith.constant 0 : i32
    %c0_i32_1 = arith.constant 0 : i32
    return %c0_i32, %c0_i32_0 : i32, i32
  }
  func.func @transform_7(%arg0: i32) -> (i32, i32) {
    %c0_i32 = arith.constant 0 : i32
    %c0_i32_0 = arith.constant 0 : i32
    return %arg0, %c0_i32 : i32, i32
  }
}

</mosaic_0001>

<llo_original>
// kernel: tpu_custom_call.1
$region0: #{tpu_custom_call.1}
  #allocation0 [shape = 'u32[]', space=smem, size = 0x4, offset = 0x4, fixed_abs, tag = 'smem constant byte address 0x4 - core index']
  #allocation1 [shape = 'u32[72,128]{1,0:T(1,128)}', space=vmem, size = 0x9000, scoped, tag = 'internal scratch']
  %s0 = inlined_call_operand.vmem [shape: f32[8,256], index: 0, kind: input, shape index: {}]
  %s1 = inlined_call_operand.vmem [shape: f32[256,64], index: 1, kind: input, shape index: {}]
  %s2 = inlined_call_operand.vmem [shape: f32[1,64], index: 2, kind: input, shape index: {}]
  %s3 = inlined_call_operand.vmem [shape: f32[64,32], index: 3, kind: input, shape index: {}]
  %s4 = inlined_call_operand.vmem [shape: f32[1,32], index: 4, kind: input, shape index: {}]
  %s5 = inlined_call_operand.vmem [shape: f32[32,16], index: 5, kind: input, shape index: {}]
  %s6 = inlined_call_operand.vmem [shape: f32[1,16], index: 6, kind: input, shape index: {}]
  %s7 = inlined_call_operand.hbm [shape: f32[8,16], index: 7, kind: output, shape index: {}]
  %s8 = sld [smem:[#allocation0]]
  $region38: #{tpu_custom_call.1} parent=0
    _
  %s10 = ssub.s32 1, %s8
  %s11 = scalar_select 0, %s10, %s8
  $region1: #{tpu_custom_call.1} parent=0
    #allocation2 [shape = 'u8[4096]{0}', space=vmem, size = 0x1000, scoped, tag = 'output window, operand 0, single buffered']
    #allocation3 [shape = 's32[1]{0}', space=sflag, size = 0x4, scoped, tag = 'scoped memory for tpu_custom_call.1']
    %12 = vsyncpa [#allocation3], 0
    // Predicated region
    $region2: #{tpu_custom_call.1} parent=1 // pred_check
      _
    $region3: #{tpu_custom_call.1} parent=1 // pred_check_branch
      %14 = sbr.rel (0) target = $region5
    $region4: #{tpu_custom_call.1} parent=1 // pred_region
      _
    $region5: #{tpu_custom_call.1} parent=1 // pred_fallthru
      _
    // Predicated region
    $region6: #{tpu_custom_call.1} parent=1 // pred_check
      _
    $region7: #{tpu_custom_call.1} parent=1 // pred_check_branch
      %16 = sbr.rel (0) target = $region9
    $region8: #{tpu_custom_call.1} parent=1 // pred_region
      _
    $region9: #{tpu_custom_call.1} parent=1 // pred_fallthru
      _
    // Predicated region
    $region10: #{tpu_custom_call.1} parent=1 // pred_check
      _
    $region11: #{tpu_custom_call.1} parent=1 // pred_check_branch
      %18 = sbr.rel (0) target = $region13
    $region12: #{tpu_custom_call.1} parent=1 // pred_region
      _
    $region13: #{tpu_custom_call.1} parent=1 // pred_fallthru
      _
    // Predicated region
    $region14: #{tpu_custom_call.1} parent=1 // pred_check
      _
    $region15: #{tpu_custom_call.1} parent=1 // pred_check_branch
      %20 = sbr.rel (0) target = $region17
    $region16: #{tpu_custom_call.1} parent=1 // pred_region
      _
    $region17: #{tpu_custom_call.1} parent=1 // pred_fallthru
      _
    // Predicated region
    $region18: #{tpu_custom_call.1} parent=1 // pred_check
      _
    $region19: #{tpu_custom_call.1} parent=1 // pred_check_branch
      %22 = sbr.rel (0) target = $region21
    $region20: #{tpu_custom_call.1} parent=1 // pred_region
      _
    $region21: #{tpu_custom_call.1} parent=1 // pred_fallthru
      _
    // Predicated region
    $region22: #{tpu_custom_call.1} parent=1 // pred_check
      _
    $region23: #{tpu_custom_call.1} parent=1 // pred_check_branch
      %24 = sbr.rel (0) target = $region25
    $region24: #{tpu_custom_call.1} parent=1 // pred_region
      _
    $region25: #{tpu_custom_call.1} parent=1 // pred_fallthru
      _
    // Predicated region
    $region26: #{tpu_custom_call.1} parent=1 // pred_check
      _
    $region27: #{tpu_custom_call.1} parent=1 // pred_check_branch
      %26 = sbr.rel (0) target = $region29
    $region28: #{tpu_custom_call.1} parent=1 // pred_region
      _
    $region29: #{tpu_custom_call.1} parent=1 // pred_fallthru
      _
    %v27 = vld [vmem:[%s0] sm:$0xff]
    %v28 = vld [vmem:[%s0 + $0x8] sm:$0xff]
    %v29 = vld [vmem:[%s1] sm:$0xff]
    %v30 = vld [vmem:[%s1 + $0x8] sm:$0xff]
    %v31 = vld [vmem:[%s1 + $0x10] sm:$0xff]
    %v32 = vld [vmem:[%s1 + $0x18] sm:$0xff]
    %v33 = vld [vmem:[%s1 + $0x20] sm:$0xff]
    %v34 = vld [vmem:[%s1 + $0x28] sm:$0xff]
    %v35 = vld [vmem:[%s1 + $0x30] sm:$0xff]
    %v36 = vld [vmem:[%s1 + $0x38] sm:$0xff]
    %v37 = vld [vmem:[%s1 + $0x40] sm:$0xff]
    %v38 = vld [vmem:[%s1 + $0x48] sm:$0xff]
    %v39 = vld [vmem:[%s1 + $0x50] sm:$0xff]
    %v40 = vld [vmem:[%s1 + $0x58] sm:$0xff]
    %v41 = vld [vmem:[%s1 + $0x60] sm:$0xff]
    %v42 = vld [vmem:[%s1 + $0x68] sm:$0xff]
    %v43 = vld [vmem:[%s1 + $0x70] sm:$0xff]
    %v44 = vld [vmem:[%s1 + $0x78] sm:$0xff]
    %v45 = vld [vmem:[%s1 + $0x80] sm:$0xff]
    %v46 = vld [vmem:[%s1 + $0x88] sm:$0xff]
    %v47 = vld [vmem:[%s1 + $0x90] sm:$0xff]
    %v48 = vld [vmem:[%s1 + $0x98] sm:$0xff]
    %v49 = vld [vmem:[%s1 + $0xa0] sm:$0xff]
    %v50 = vld [vmem:[%s1 + $0xa8] sm:$0xff]
    %v51 = vld [vmem:[%s1 + $0xb0] sm:$0xff]
    %v52 = vld [vmem:[%s1 + $0xb8] sm:$0xff]
    %v53 = vld [vmem:[%s1 + $0xc0] sm:$0xff]
    %v54 = vld [vmem:[%s1 + $0xc8] sm:$0xff]
    %v55 = vld [vmem:[%s1 + $0xd0] sm:$0xff]
    %v56 = vld [vmem:[%s1 + $0xd8] sm:$0xff]
    %v57 = vld [vmem:[%s1 + $0xe0] sm:$0xff]
    %v58 = vld [vmem:[%s1 + $0xe8] sm:$0xff]
    %v59 = vld [vmem:[%s1 + $0xf0] sm:$0xff]
    %v60 = vld [vmem:[%s1 + $0xf8] sm:$0xff]
    %v61 = vld [vmem:[%s2] sm:$0x1]
    %v63 = vperm.slane %v61, 0
    %65 = vmatpush.msra.mxu0 %v44
    %66 = vmatpush.msra.mxu0 %v43
    %67 = vmatpush.msra.mxu0 %v42
    %68 = vmatpush.msra.mxu0 %v41
    %69 = vmatpush.msra.mxu0 %v40
    %70 = vmatpush.msra.mxu0 %v39
    %71 = vmatpush.msra.mxu0 %v38
    %72 = vmatpush.msra.mxu0 %v37
    %73 = vmatpush.msra.mxu0 %v36
    %74 = vmatpush.msra.mxu0 %v35
    %75 = vmatpush.msra.mxu0 %v34
    %76 = vmatpush.msra.mxu0 %v33
    %77 = vmatpush.msra.mxu0 %v32
    %78 = vmatpush.msra.mxu0 %v31
    %79 = vmatpush.msra.mxu0 %v30
    %80 = vmatpush.msra.mxu0 %v29
    %81 = vmatmul.f32.gmra.mxu0 %v27
    %v82 = vpop.f32.mrf.mxu0
    %v83 = vadd.f32 %v63, %v82
    %84 = vdwg.mxu0
    %85 = vmatpush.msra.mxu0 %v60
    %86 = vmatpush.msra.mxu0 %v59
    %87 = vmatpush.msra.mxu0 %v58
    %88 = vmatpush.msra.mxu0 %v57
    %89 = vmatpush.msra.mxu0 %v56
    %90 = vmatpush.msra.mxu0 %v55
    %91 = vmatpush.msra.mxu0 %v54
    %92 = vmatpush.msra.mxu0 %v53
    %93 = vmatpush.msra.mxu0 %v52
    %94 = vmatpush.msra.mxu0 %v51
    %95 = vmatpush.msra.mxu0 %v50
    %96 = vmatpush.msra.mxu0 %v49
    %97 = vmatpush.msra.mxu0 %v48
    %98 = vmatpush.msra.mxu0 %v47
    %99 = vmatpush.msra.mxu0 %v46
    %100 = vmatpush.msra.mxu0 %v45
    %101 = vmatmul.f32.gmra.mxu0 %v28
    %v102 = vpop.f32.mrf.mxu0
    %v103 = vadd.f32 %v83, %v102
    %104 = vdwg.mxu0
    %v105 = vmax.f32 %v103, 0.0
    %v106 = vld [vmem:[%s3] sm:$0xff]
    %v107 = vld [vmem:[%s3 + $0x8] sm:$0xff]
    %v108 = vld [vmem:[%s3 + $0x10] sm:$0xff]
    %v109 = vld [vmem:[%s3 + $0x18] sm:$0xff]
    %v110 = vld [vmem:[%s3 + $0x20] sm:$0xff]
    %v111 = vld [vmem:[%s3 + $0x28] sm:$0xff]
    %v112 = vld [vmem:[%s3 + $0x30] sm:$0xff]
    %v113 = vld [vmem:[%s3 + $0x38] sm:$0xff]
    %v114 = vld [vmem:[%s4] sm:$0x1]
    %v116 = vperm.slane %v114, 0
    %vm118 = vcmask 523264
    %v120 = vsel %vm118, %v105, 0
    %122 = vmatpush.msra.mxu0 0.0
    %123 = vmatpush.msra.mxu0 0.0
    %124 = vmatpush.msra.mxu0 0.0
    %125 = vmatpush.msra.mxu0 0.0
    %126 = vmatpush.msra.mxu0 0.0
    %127 = vmatpush.msra.mxu0 0.0
    %128 = vmatpush.msra.mxu0 0.0
    %129 = vmatpush.msra.mxu0 0.0
    %130 = vmatpush.msra.mxu0 %v113
    %131 = vmatpush.msra.mxu0 %v112
    %132 = vmatpush.msra.mxu0 %v111
    %133 = vmatpush.msra.mxu0 %v110
    %134 = vmatpush.msra.mxu0 %v109
    %135 = vmatpush.msra.mxu0 %v108
    %136 = vmatpush.msra.mxu0 %v107
    %137 = vmatpush.msra.mxu0 %v106
    %138 = vmatmul.f32.gmra.mxu0 %v120
    %v139 = vpop.f32.mrf.mxu0
    %v140 = vadd.f32 %v116, %v139
    %141 = vdwg.mxu0
    %v142 = vmax.f32 %v140, 0.0
    %v143 = vld [vmem:[%s5] sm:$0xff]
    %v144 = vld [vmem:[%s5 + $0x8] sm:$0xff]
    %v145 = vld [vmem:[%s5 + $0x10] sm:$0xff]
    %v146 = vld [vmem:[%s5 + $0x18] sm:$0xff]
    %v147 = vld [vmem:[%s6] sm:$0x1]
    %v149 = vperm.slane %v147, 0
    %vm151 = vcmask 261120
    %v153 = vsel %vm151, %v142, 0
    %155 = vmatpush.msra.mxu0 0.0
    %156 = vmatpush.msra.mxu0 0.0
    %157 = vmatpush.msra.mxu0 0.0
    %158 = vmatpush.msra.mxu0 0.0
    %159 = vmatpush.msra.mxu0 0.0
    %160 = vmatpush.msra.mxu0 0.0
    %161 = vmatpush.msra.mxu0 0.0
    %162 = vmatpush.msra.mxu0 0.0
    %163 = vmatpush.msra.mxu0 0.0
    %164 = vmatpush.msra.mxu0 0.0
    %165 = vmatpush.msra.mxu0 0.0
    %166 = vmatpush.msra.mxu0 0.0
    %167 = vmatpush.msra.mxu0 %v146
    %168 = vmatpush.msra.mxu0 %v145
    %169 = vmatpush.msra.mxu0 %v144
    %170 = vmatpush.msra.mxu0 %v143
    %171 = vmatmul.f32.gmra.mxu0 %v153
    %v172 = vpop.f32.mrf.mxu0
    %v173 = vadd.f32 %v149, %v172
    %174 = vdwg.mxu0
    %vm175 = vcmask 130048
    %176 = vst.msk [vmem:[#allocation2] sm:$0xff] %vm175, %v173
    // Predicated region
    $region30: #{tpu_custom_call.1} parent=1 // pred_check
      _
    $region31: #{tpu_custom_call.1} parent=1 // pred_check_branch
      %178 = sbr.rel (0) target = $region33
    $region32: #{tpu_custom_call.1} parent=1 // pred_region
      %180 = vsyncadd [#allocation3], 0
      %s182 = sshll.u32 [#allocation2], 4
      %s183 = int_to_ptr.vmem [resolvable:$true] %s182
      %s184 = sshll.u32 %s7, 4
      %s185 = int_to_ptr.hbm [resolvable:$true] %s184
      %187 = dma.vmem_to_hbm [thread:$0]  %s183, 128, %s185, [#allocation3]
    $region33: #{tpu_custom_call.1} parent=1 // pred_fallthru
      _
    // Predicated region
    $region34: #{tpu_custom_call.1} parent=1 // pred_check
      _
    $region35: #{tpu_custom_call.1} parent=1 // pred_check_branch
      %189 = sbr.rel (0) target = $region37
    $region36: #{tpu_custom_call.1} parent=1 // pred_region
      %191 = dma.done [#allocation3], 128
    $region37: #{tpu_custom_call.1} parent=1 // pred_fallthru
      _
    %192 = vsyncpa [#allocation3], 1

</llo_original>
